<compile_context>
chip_gen: v7x
topology: tpu7x:2x2x1
jax: 0.10.0
libtpu: 0.0.40
codegen_flags: <defaults>
</compile_context>

<pallas_src>
import functools

import jax
import jax.numpy as jnp
from jax.experimental import pallas as pl
from jax.experimental.pallas import tpu as pltpu

LN_EPS = 1e-5  # torch.nn.LayerNorm default


def _proj_norm_kernel(x_ref, w_ref, bias_ref, gb_ref, o_ref, *,
                      tokens_per_block, d_out):
    """One grid step = one group of extra-context tokens.

    x_ref:    (Bp, d_in)                    image embeddings (f32, sublane-padded batch)
    w_ref:    (d_in, tokens_per_block*d_out) bf16 column slab of the Linear weight
    bias_ref: (1, tokens_per_block*d_out)   Linear bias slab (f32)
    gb_ref:   (2, d_out)                    [gamma; beta] LayerNorm affine params (f32)
    o_ref:    (Bp, tokens_per_block*d_out)  lane-dense output slab
    """
    # Linear: bf16 operands on the MXU, f32 accumulation.
    x = x_ref[...].astype(jnp.bfloat16)
    y = jnp.dot(x, w_ref[...], preferred_element_type=jnp.float32)
    y = y + bias_ref[...]                 # bias, broadcast over batch rows

    gamma = gb_ref[0:1, :]                # (1, d_out) — same for every token
    beta = gb_ref[1:2, :]

    # Per-token LayerNorm over the last (cross_attention_dim) axis, biased variance
    # (torch semantics). Static Python loop; every slice is 128-lane aligned and the
    # normalized token is stored directly (no concatenate / extra block copy).
    for t in range(tokens_per_block):
        sl = slice(t * d_out, (t + 1) * d_out)
        yt = y[:, sl]
        mean = jnp.mean(yt, axis=-1, keepdims=True)
        centered = yt - mean
        var = jnp.mean(centered * centered, axis=-1, keepdims=True)
        yn = centered * jax.lax.rsqrt(var + LN_EPS)
        o_ref[:, sl] = (yn * gamma + beta).astype(o_ref.dtype)


def prepare_image_proj_params(w, b, gamma, beta):
    """Hoisted, once-per-model parameter prep (do NOT call per forward)."""
    n = b.shape[0]
    return dict(
        w_bf16=w.astype(jnp.bfloat16),                       # halves weight HBM traffic
        bias=b.astype(jnp.float32).reshape(1, n),
        gamma_beta=jnp.stack([gamma.astype(jnp.float32),
                              beta.astype(jnp.float32)], axis=0),
    )


def _tpu_topology():
    """Best-effort (vmem_capacity_bytes, multi_tensorcore) detection."""
    vmem_cap = 64 << 20   # conservative fallback (v7x per-TC VMEM)
    multi_tc = False
    try:
        info = pltpu.get_tpu_info()
        vmem_cap = int(getattr(info, "vmem_capacity_bytes", vmem_cap))
    except Exception:
        pass
    try:
        kind = jax.devices()[0].device_kind.lower()
        multi_tc = "v7" in kind           # v5e / v6e have a single TensorCore
    except Exception:
        pass
    return vmem_cap, multi_tc


def _pick_num_token_groups(T, d_in, d_out, multi_tc, vmem_budget_bytes):
    """Smallest divisor of T whose double-buffered bf16 W slab fits the budget.

    Single-TC chips want G=1 (one big DMA, no extra grid step); multi-TC chips
    want G>=2 so the 'parallel' grid axis can shard W across both TensorCores.
    """
    divisors = [g for g in range(1, T + 1) if T % g == 0]
    min_g = 2 if (multi_tc and T >= 2) else 1
    best = divisors[-1]
    for g in divisors:
        if g < min_g:
            continue
        slab_bytes = 2 * d_in * (T // g) * d_out * 2   # double-buffered bf16 slab
        if slab_bytes <= vmem_budget_bytes:
            return g
    return best


def image_proj_model_forward(image_embeds, params, clip_extra_context_tokens,
                             cross_attention_dim, *, num_token_groups=None):
    """image_embeds: (B, clip_embeddings_dim) -> (B, T, cross_attention_dim)."""
    w_bf16 = params["w_bf16"]
    bias = params["bias"]
    gb = params["gamma_beta"]

    B, d_in = image_embeds.shape
    T = clip_extra_context_tokens
    d_out = cross_attention_dim
    N = T * d_out
    assert w_bf16.shape == (d_in, N)
    assert bias.shape == (1, N)
    assert gb.shape == (2, d_out)

    vmem_cap, multi_tc = _tpu_topology()
    if num_token_groups is None:
        num_token_groups = _pick_num_token_groups(
            T, d_in, d_out, multi_tc, vmem_budget_bytes=int(vmem_cap * 0.5))
    G = num_token_groups
    assert T % G == 0, "num_token_groups must divide clip_extra_context_tokens"
    TG = T // G
    n_block = TG * d_out

    # Pad batch to a full 8-row f32 sublane tile: unmasked x loads / output stores.
    pad_rows = (-B) % 8
    x_in = image_embeds
    if pad_rows:
        x_in = jnp.concatenate(
            [image_embeds, jnp.zeros((pad_rows, d_in), image_embeds.dtype)], axis=0)
    Bp = B + pad_rows

    kernel = functools.partial(_proj_norm_kernel, tokens_per_block=TG, d_out=d_out)

    # Explicit scoped-VMEM budget (double-buffered blocks for every operand) so the
    # big lane-dense W slab survives the 16/32 MiB default limits on v5e/v6e/v7x.
    vmem_need = (2 * d_in * n_block * 2            # W slab (bf16), double-buffered
                 + 2 * Bp * d_in * 4               # x
                 + 2 * Bp * n_block * 4            # output slab
                 + 2 * (8 * n_block + 8 * d_out) * 4)  # bias + gamma/beta (sublane-padded)
    vmem_limit = max(int(vmem_need * 1.25) + (2 << 20), 16 << 20)
    vmem_limit = min(vmem_limit, max(vmem_cap - (8 << 20), 16 << 20))

    cost = pl.CostEstimate(
        flops=2 * Bp * d_in * N,
        transcendentals=Bp * T,
        bytes_accessed=2 * d_in * N + 4 * Bp * (d_in + N) + 4 * (N + 2 * d_out),
    )

    out_flat = pl.pallas_call(
        kernel,
        out_shape=jax.ShapeDtypeStruct((Bp, N), image_embeds.dtype),
        grid=(G,),
        in_specs=[
            pl.BlockSpec((Bp, d_in), lambda g: (0, 0)),        # x: full, resident
            pl.BlockSpec((d_in, n_block), lambda g: (0, g)),   # W column slab per group
            pl.BlockSpec((1, n_block), lambda g: (0, g)),      # Linear bias slab
            pl.BlockSpec((2, d_out), lambda g: (0, 0)),        # gamma/beta (tiny, full)
        ],
        out_specs=pl.BlockSpec((Bp, n_block), lambda g: (0, g)),
        compiler_params=pltpu.CompilerParams(
            dimension_semantics=("parallel",),
            vmem_limit_bytes=vmem_limit),
        cost_estimate=cost,
    )(x_in, w_bf16, bias, gb)

    # (B, T*d_out) -> (B, T, d_out): metadata-only reshape, matches
    # torch's proj(...).reshape(-1, T, cross_attention_dim).
    return out_flat[:B].reshape(B, T, d_out)


def _reference_forward(image_embeds, w, b, gamma, beta, T, d_out):
    # Same bf16-weight / f32-accumulation math as the kernel, in plain JAX.
    y = jnp.dot(image_embeds.astype(jnp.bfloat16), w.astype(jnp.bfloat16),
                preferred_element_type=jnp.float32) + b
    y = y.reshape(-1, T, d_out)
    mean = jnp.mean(y, axis=-1, keepdims=True)
    var = jnp.mean((y - mean) ** 2, axis=-1, keepdims=True)
    return (y - mean) / jnp.sqrt(var + LN_EPS) * gamma + beta


if __name__ == "__main__":
    # Small, TPU-friendly shapes consistent with the module's forward.
    batch = 2
    clip_embeddings_dim = 128
    cross_attention_dim = 128
    clip_extra_context_tokens = 4

    key = jax.random.PRNGKey(0)
    k_x, k_w, k_b = jax.random.split(key, 3)

    image_embeds = jax.random.normal(
        k_x, (batch, clip_embeddings_dim), dtype=jnp.float32)

    # Deterministic synthetic parameters (Linear weight/bias, LayerNorm affine params).
    w = jax.random.normal(
        k_w, (clip_embeddings_dim, clip_extra_context_tokens * cross_attention_dim),
        dtype=jnp.float32) * (1.0 / jnp.sqrt(clip_embeddings_dim))
    b = jax.random.normal(
        k_b, (clip_extra_context_tokens * cross_attention_dim,),
        dtype=jnp.float32) * 0.01
    gamma = jnp.ones((cross_attention_dim,), dtype=jnp.float32)   # torch default
    beta = jnp.zeros((cross_attention_dim,), dtype=jnp.float32)   # torch default

    # Parameter prep happens ONCE (model init), not per forward call.
    params = prepare_image_proj_params(w, b, gamma, beta)

    out = image_proj_model_forward(
        image_embeds, params,
        clip_extra_context_tokens, cross_attention_dim)
    out = jax.block_until_ready(out)

    assert out.shape == (batch, clip_extra_context_tokens, cross_attention_dim)

    ref = _reference_forward(image_embeds, w, b, gamma, beta,
                             clip_extra_context_tokens, cross_attention_dim)
    assert jnp.allclose(out, ref, atol=2e-2, rtol=2e-2), "mismatch vs JAX reference"

    print("KERNEL_OK")
</pallas_src>

<mosaic_0001>
module attributes {stable_mosaic.version = 11 : i64} {
  func.func @_proj_norm_kernel(%arg0: i32, %arg1: memref<8x128xf32, #tpu.memory_space<vmem>>, %arg2: memref<128x512xbf16, #tpu.memory_space<vmem>>, %arg3: memref<1x512xf32, #tpu.memory_space<vmem>>, %arg4: memref<2x128xf32, #tpu.memory_space<vmem>>, %arg5: memref<8x512xf32, #tpu.memory_space<vmem>>) attributes {dimension_semantics = [#tpu.dimension_semantics<parallel>], iteration_bounds = array<i64: 1>, scalar_prefetch = 0 : i64, scratch_operands = 0 : i64, tpu.core_type = #tpu.core_type<tc>, window_params = [{pipeline_mode = #tpu.pipeline_mode<synchronous>, transform_indices = @transform_0, window_bounds = array<i64: 8, 128>}, {transform_indices = @transform_1, window_bounds = array<i64: 128, 512>}, {transform_indices = @transform_2, window_bounds = array<i64: 1, 512>}, {pipeline_mode = #tpu.pipeline_mode<synchronous>, transform_indices = @transform_3, window_bounds = array<i64: 2, 128>}, {transform_indices = @transform_4, window_bounds = array<i64: 8, 512>}]} {
    %c0 = arith.constant 0 : index
    %c0_0 = arith.constant 0 : index
    %0 = vector.load %arg1[%c0, %c0_0] : memref<8x128xf32, #tpu.memory_space<vmem>>, vector<8x128xf32>
    %1 = arith.truncf %0 : vector<8x128xf32> to vector<8x128xbf16>
    %c0_1 = arith.constant 0 : index
    %c0_2 = arith.constant 0 : index
    %2 = vector.load %arg2[%c0_1, %c0_2] : memref<128x512xbf16, #tpu.memory_space<vmem>>, vector<128x512xbf16>
    %cst = arith.constant dense<0.000000e+00> : vector<8x512xf32>
    %3 = tpu.matmul %1, %2, %cst {dimension_numbers = #tpu.dot_dimension_numbers<[1], [0], [0], [1], [0, 0, 1, 1], [], []>} : vector<8x128xbf16>, vector<128x512xbf16>, vector<8x512xf32> -> vector<8x512xf32>
    %c0_3 = arith.constant 0 : index
    %c0_4 = arith.constant 0 : index
    %4 = vector.load %arg3[%c0_3, %c0_4] : memref<1x512xf32, #tpu.memory_space<vmem>>, vector<1x512xf32>
    %5 = vector.broadcast %4 : vector<1x512xf32> to vector<8x512xf32>
    %6 = arith.addf %3, %5 : vector<8x512xf32>
    %c0_5 = arith.constant 0 : index
    %c0_6 = arith.constant 0 : index
    %7 = vector.load %arg4[%c0_5, %c0_6] : memref<2x128xf32, #tpu.memory_space<vmem>>, vector<1x128xf32>
    %c1 = arith.constant 1 : index
    %c0_7 = arith.constant 0 : index
    %8 = vector.load %arg4[%c1, %c0_7] : memref<2x128xf32, #tpu.memory_space<vmem>>, vector<1x128xf32>
    %9 = vector.extract_strided_slice %6 {offsets = [0, 0], sizes = [8, 128], strides = [1, 1]} : vector<8x512xf32> to vector<8x128xf32>
    %cst_8 = arith.constant dense<0.000000e+00> : vector<8xf32>
    %10 = vector.multi_reduction <add>, %9, %cst_8 [1] : vector<8x128xf32> to vector<8xf32>
    %11 = vector.shape_cast %10 : vector<8xf32> to vector<8x1xf32>
    %cst_9 = arith.constant 1.280000e+02 : f32
    %12 = vector.broadcast %cst_9 : f32 to vector<8x1xf32>
    %13 = arith.divf %11, %12 : vector<8x1xf32>
    %14 = vector.broadcast %13 : vector<8x1xf32> to vector<8x128xf32>
    %15 = arith.subf %9, %14 : vector<8x128xf32>
    %16 = arith.mulf %15, %15 : vector<8x128xf32>
    %cst_10 = arith.constant dense<0.000000e+00> : vector<8xf32>
    %17 = vector.multi_reduction <add>, %16, %cst_10 [1] : vector<8x128xf32> to vector<8xf32>
    %18 = vector.shape_cast %17 : vector<8xf32> to vector<8x1xf32>
    %cst_11 = arith.constant 1.280000e+02 : f32
    %19 = vector.broadcast %cst_11 : f32 to vector<8x1xf32>
    %20 = arith.divf %18, %19 : vector<8x1xf32>
    %cst_12 = arith.constant 9.99999974E-6 : f32
    %21 = vector.broadcast %cst_12 : f32 to vector<8x1xf32>
    %22 = arith.addf %20, %21 : vector<8x1xf32>
    %23 = math.rsqrt %22 : vector<8x1xf32>
    %24 = vector.broadcast %23 : vector<8x1xf32> to vector<8x128xf32>
    %25 = arith.mulf %15, %24 : vector<8x128xf32>
    %26 = vector.broadcast %7 : vector<1x128xf32> to vector<8x128xf32>
    %27 = arith.mulf %25, %26 : vector<8x128xf32>
    %28 = vector.broadcast %8 : vector<1x128xf32> to vector<8x128xf32>
    %29 = arith.addf %27, %28 : vector<8x128xf32>
    %c0_13 = arith.constant 0 : index
    %c0_14 = arith.constant 0 : index
    %30 = vector.load %arg5[%c0_13, %c0_14] : memref<8x512xf32, #tpu.memory_space<vmem>>, vector<8x128xf32>
    tpu.vector_store %arg5[%c0_13, %c0_14], %29 {strides = array<i32>} : memref<8x512xf32, #tpu.memory_space<vmem>>, vector<8x128xf32>,
    %31 = vector.extract_strided_slice %6 {offsets = [0, 128], sizes = [8, 128], strides = [1, 1]} : vector<8x512xf32> to vector<8x128xf32>
    %cst_15 = arith.constant dense<0.000000e+00> : vector<8xf32>
    %32 = vector.multi_reduction <add>, %31, %cst_15 [1] : vector<8x128xf32> to vector<8xf32>
    %33 = vector.shape_cast %32 : vector<8xf32> to vector<8x1xf32>
    %cst_16 = arith.constant 1.280000e+02 : f32
    %34 = vector.broadcast %cst_16 : f32 to vector<8x1xf32>
    %35 = arith.divf %33, %34 : vector<8x1xf32>
    %36 = vector.broadcast %35 : vector<8x1xf32> to vector<8x128xf32>
    %37 = arith.subf %31, %36 : vector<8x128xf32>
    %38 = arith.mulf %37, %37 : vector<8x128xf32>
    %cst_17 = arith.constant dense<0.000000e+00> : vector<8xf32>
    %39 = vector.multi_reduction <add>, %38, %cst_17 [1] : vector<8x128xf32> to vector<8xf32>
    %40 = vector.shape_cast %39 : vector<8xf32> to vector<8x1xf32>
    %cst_18 = arith.constant 1.280000e+02 : f32
    %41 = vector.broadcast %cst_18 : f32 to vector<8x1xf32>
    %42 = arith.divf %40, %41 : vector<8x1xf32>
    %cst_19 = arith.constant 9.99999974E-6 : f32
    %43 = vector.broadcast %cst_19 : f32 to vector<8x1xf32>
    %44 = arith.addf %42, %43 : vector<8x1xf32>
    %45 = math.rsqrt %44 : vector<8x1xf32>
    %46 = vector.broadcast %45 : vector<8x1xf32> to vector<8x128xf32>
    %47 = arith.mulf %37, %46 : vector<8x128xf32>
    %48 = vector.broadcast %7 : vector<1x128xf32> to vector<8x128xf32>
    %49 = arith.mulf %47, %48 : vector<8x128xf32>
    %50 = vector.broadcast %8 : vector<1x128xf32> to vector<8x128xf32>
    %51 = arith.addf %49, %50 : vector<8x128xf32>
    %c0_20 = arith.constant 0 : index
    %c128 = arith.constant 128 : index
    %52 = vector.load %arg5[%c0_20, %c128] : memref<8x512xf32, #tpu.memory_space<vmem>>, vector<8x128xf32>
    tpu.vector_store %arg5[%c0_20, %c128], %51 {strides = array<i32>} : memref<8x512xf32, #tpu.memory_space<vmem>>, vector<8x128xf32>,
    %53 = vector.extract_strided_slice %6 {offsets = [0, 256], sizes = [8, 128], strides = [1, 1]} : vector<8x512xf32> to vector<8x128xf32>
    %cst_21 = arith.constant dense<0.000000e+00> : vector<8xf32>
    %54 = vector.multi_reduction <add>, %53, %cst_21 [1] : vector<8x128xf32> to vector<8xf32>
    %55 = vector.shape_cast %54 : vector<8xf32> to vector<8x1xf32>
    %cst_22 = arith.constant 1.280000e+02 : f32
    %56 = vector.broadcast %cst_22 : f32 to vector<8x1xf32>
    %57 = arith.divf %55, %56 : vector<8x1xf32>
    %58 = vector.broadcast %57 : vector<8x1xf32> to vector<8x128xf32>
    %59 = arith.subf %53, %58 : vector<8x128xf32>
    %60 = arith.mulf %59, %59 : vector<8x128xf32>
    %cst_23 = arith.constant dense<0.000000e+00> : vector<8xf32>
    %61 = vector.multi_reduction <add>, %60, %cst_23 [1] : vector<8x128xf32> to vector<8xf32>
    %62 = vector.shape_cast %61 : vector<8xf32> to vector<8x1xf32>
    %cst_24 = arith.constant 1.280000e+02 : f32
    %63 = vector.broadcast %cst_24 : f32 to vector<8x1xf32>
    %64 = arith.divf %62, %63 : vector<8x1xf32>
    %cst_25 = arith.constant 9.99999974E-6 : f32
    %65 = vector.broadcast %cst_25 : f32 to vector<8x1xf32>
    %66 = arith.addf %64, %65 : vector<8x1xf32>
    %67 = math.rsqrt %66 : vector<8x1xf32>
    %68 = vector.broadcast %67 : vector<8x1xf32> to vector<8x128xf32>
    %69 = arith.mulf %59, %68 : vector<8x128xf32>
    %70 = vector.broadcast %7 : vector<1x128xf32> to vector<8x128xf32>
    %71 = arith.mulf %69, %70 : vector<8x128xf32>
    %72 = vector.broadcast %8 : vector<1x128xf32> to vector<8x128xf32>
    %73 = arith.addf %71, %72 : vector<8x128xf32>
    %c0_26 = arith.constant 0 : index
    %c256 = arith.constant 256 : index
    %74 = vector.load %arg5[%c0_26, %c256] : memref<8x512xf32, #tpu.memory_space<vmem>>, vector<8x128xf32>
    tpu.vector_store %arg5[%c0_26, %c256], %73 {strides = array<i32>} : memref<8x512xf32, #tpu.memory_space<vmem>>, vector<8x128xf32>,
    %75 = vector.extract_strided_slice %6 {offsets = [0, 384], sizes = [8, 128], strides = [1, 1]} : vector<8x512xf32> to vector<8x128xf32>
    %cst_27 = arith.constant dense<0.000000e+00> : vector<8xf32>
    %76 = vector.multi_reduction <add>, %75, %cst_27 [1] : vector<8x128xf32> to vector<8xf32>
    %77 = vector.shape_cast %76 : vector<8xf32> to vector<8x1xf32>
    %cst_28 = arith.constant 1.280000e+02 : f32
    %78 = vector.broadcast %cst_28 : f32 to vector<8x1xf32>
    %79 = arith.divf %77, %78 : vector<8x1xf32>
    %80 = vector.broadcast %79 : vector<8x1xf32> to vector<8x128xf32>
    %81 = arith.subf %75, %80 : vector<8x128xf32>
    %82 = arith.mulf %81, %81 : vector<8x128xf32>
    %cst_29 = arith.constant dense<0.000000e+00> : vector<8xf32>
    %83 = vector.multi_reduction <add>, %82, %cst_29 [1] : vector<8x128xf32> to vector<8xf32>
    %84 = vector.shape_cast %83 : vector<8xf32> to vector<8x1xf32>
    %cst_30 = arith.constant 1.280000e+02 : f32
    %85 = vector.broadcast %cst_30 : f32 to vector<8x1xf32>
    %86 = arith.divf %84, %85 : vector<8x1xf32>
    %cst_31 = arith.constant 9.99999974E-6 : f32
    %87 = vector.broadcast %cst_31 : f32 to vector<8x1xf32>
    %88 = arith.addf %86, %87 : vector<8x1xf32>
    %89 = math.rsqrt %88 : vector<8x1xf32>
    %90 = vector.broadcast %89 : vector<8x1xf32> to vector<8x128xf32>
    %91 = arith.mulf %81, %90 : vector<8x128xf32>
    %92 = vector.broadcast %7 : vector<1x128xf32> to vector<8x128xf32>
    %93 = arith.mulf %91, %92 : vector<8x128xf32>
    %94 = vector.broadcast %8 : vector<1x128xf32> to vector<8x128xf32>
    %95 = arith.addf %93, %94 : vector<8x128xf32>
    %c0_32 = arith.constant 0 : index
    %c384 = arith.constant 384 : index
    %96 = vector.load %arg5[%c0_32, %c384] : memref<8x512xf32, #tpu.memory_space<vmem>>, vector<8x128xf32>
    tpu.vector_store %arg5[%c0_32, %c384], %95 {strides = array<i32>} : memref<8x512xf32, #tpu.memory_space<vmem>>, vector<8x128xf32>,
    return
  }
  func.func @transform_0(%arg0: i32) -> (i32, i32) {
    %c0_i32 = arith.constant 0 : i32
    %c0_i32_0 = arith.constant 0 : i32
    %c0_i32_1 = arith.constant 0 : i32
    return %c0_i32, %c0_i32_0 : i32, i32
  }
  func.func @transform_1(%arg0: i32) -> (i32, i32) {
    %c0_i32 = arith.constant 0 : i32
    %c0_i32_0 = arith.constant 0 : i32
    return %c0_i32, %arg0 : i32, i32
  }
  func.func @transform_2(%arg0: i32) -> (i32, i32) {
    %c0_i32 = arith.constant 0 : i32
    %c0_i32_0 = arith.constant 0 : i32
    return %c0_i32, %arg0 : i32, i32
  }
  func.func @transform_3(%arg0: i32) -> (i32, i32) {
    %c0_i32 = arith.constant 0 : i32
    %c0_i32_0 = arith.constant 0 : i32
    %c0_i32_1 = arith.constant 0 : i32
    return %c0_i32, %c0_i32_0 : i32, i32
  }
  func.func @transform_4(%arg0: i32) -> (i32, i32) {
    %c0_i32 = arith.constant 0 : i32
    %c0_i32_0 = arith.constant 0 : i32
    return %c0_i32, %arg0 : i32, i32
  }
}

</mosaic_0001>

<llo_original>
// kernel: tpu_custom_call.1
$region0: #{tpu_custom_call.1}
  #allocation0 [shape = 'u32[]', space=smem, size = 0x4, offset = 0x4, fixed_abs, tag = 'smem constant byte address 0x4 - core index']
  #allocation1 [shape = 'u32[144,128]{1,0:T(1,128)}', space=vmem, size = 0x12000, scoped, tag = 'internal scratch']
  %s0 = inlined_call_operand.hbm [shape: f32[8,128], index: 0, kind: input, shape index: {}]
  %s1 = inlined_call_operand.hbm [shape: bf16[128,512], index: 1, kind: input, shape index: {}]
  %s2 = inlined_call_operand.vmem [shape: f32[1,512], index: 2, kind: input, shape index: {}]
  %s3 = inlined_call_operand.vmem [shape: f32[2,128], index: 3, kind: input, shape index: {}]
  %s4 = inlined_call_operand.hbm [shape: f32[8,512], index: 4, kind: output, shape index: {}]
  %s5 = sld [smem:[#allocation0]]
  $region34: #{tpu_custom_call.1} parent=0
    _
  %s7 = ssub.s32 1, %s5
  %s8 = scalar_select 0, %s7, %s5
  $region1: #{tpu_custom_call.1} parent=0
    #allocation2 [shape = 'u8[4096]{0}', space=vmem, size = 0x1000, scoped, tag = 'input window, operand 0, single buffered']
    #allocation3 [shape = 's32[1]{0}', space=sflag, size = 0x4, scoped, tag = 'scoped memory for tpu_custom_call.1']
    #allocation4 [shape = 's32[1]{0}', space=sflag, size = 0x4, scoped, tag = 'scoped memory for tpu_custom_call.1']
    #allocation5 [shape = 'u8[131072]{0}', space=vmem, size = 0x20000, scoped, tag = 'input window, operand 1, single buffered']
    #allocation6 [shape = 's32[1]{0}', space=sflag, size = 0x4, scoped, tag = 'scoped memory for tpu_custom_call.1']
    #allocation7 [shape = 'u8[16384]{0}', space=vmem, size = 0x4000, scoped, tag = 'output window, operand 0, single buffered']
    %9 = vsyncpa [#allocation3], 0
    %10 = vsyncpa [#allocation6], 0
    %11 = vsyncpa [#allocation4], 0
    // Predicated region
    $region2: #{tpu_custom_call.1} parent=1 // pred_check
      _
    $region3: #{tpu_custom_call.1} parent=1 // pred_check_branch
      %13 = sbr.rel (0) target = $region5
    $region4: #{tpu_custom_call.1} parent=1 // pred_region
      %s15 = ssub.s32 128, 128
      %16 = vsyncadd [#allocation3], %s15
      %s18 = sshll.u32 [#allocation2], 4
      %s19 = int_to_ptr.vmem [resolvable:$true] %s18
      %21 = dma.hbm_to_vmem [thread:$0]  %s0, 128, %s19, [#allocation3]
    $region5: #{tpu_custom_call.1} parent=1 // pred_fallthru
      _
    // Predicated region
    $region6: #{tpu_custom_call.1} parent=1 // pred_check
      _
    $region7: #{tpu_custom_call.1} parent=1 // pred_check_branch
      %23 = sbr.rel (0) target = $region9
    $region8: #{tpu_custom_call.1} parent=1 // pred_region
      %s25 = ssub.s32 4096, 4096
      %26 = vsyncadd [#allocation6], %s25
      %s27 = sshll.u32 [#allocation5], 4
      %s28 = int_to_ptr.vmem [resolvable:$true] %s27
      %33 = dma.hbm_to_vmem [thread:$0]  %s1, 4096, %s28, [#allocation6], 256, 256, 16
    $region9: #{tpu_custom_call.1} parent=1 // pred_fallthru
      _
    // Predicated region
    $region10: #{tpu_custom_call.1} parent=1 // pred_check
      _
    $region11: #{tpu_custom_call.1} parent=1 // pred_check_branch
      %35 = sbr.rel (0) target = $region13
    $region12: #{tpu_custom_call.1} parent=1 // pred_region
      _
    $region13: #{tpu_custom_call.1} parent=1 // pred_fallthru
      _
    // Predicated region
    $region14: #{tpu_custom_call.1} parent=1 // pred_check
      _
    $region15: #{tpu_custom_call.1} parent=1 // pred_check_branch
      %37 = sbr.rel (0) target = $region17
    $region16: #{tpu_custom_call.1} parent=1 // pred_region
      _
    $region17: #{tpu_custom_call.1} parent=1 // pred_fallthru
      _
    // Predicated region
    $region18: #{tpu_custom_call.1} parent=1 // pred_check
      _
    $region19: #{tpu_custom_call.1} parent=1 // pred_check_branch
      %39 = sbr.rel (0) target = $region21
    $region20: #{tpu_custom_call.1} parent=1 // pred_region
      %40 = dma.done [#allocation3], 128
    $region21: #{tpu_custom_call.1} parent=1 // pred_fallthru
      _
    // Predicated region
    $region22: #{tpu_custom_call.1} parent=1 // pred_check
      _
    $region23: #{tpu_custom_call.1} parent=1 // pred_check_branch
      %42 = sbr.rel (0) target = $region25
    $region24: #{tpu_custom_call.1} parent=1 // pred_region
      %43 = dma.done [#allocation6], 4096
    $region25: #{tpu_custom_call.1} parent=1 // pred_fallthru
      _
    %v45 = vld [vmem:[#allocation2] sm:$0xff]
    %v46 = vpack.c.bf16 %v45, %v45
    %v47 = vld [vmem:[#allocation5] sm:$0xff]
    %v48 = vld [vmem:[#allocation5 + $0x8] sm:$0xff]
    %v49 = vld [vmem:[#allocation5 + $0x10] sm:$0xff]
    %v50 = vld [vmem:[#allocation5 + $0x18] sm:$0xff]
    %v51 = vld [vmem:[#allocation5 + $0x20] sm:$0xff]
    %v52 = vld [vmem:[#allocation5 + $0x28] sm:$0xff]
    %v53 = vld [vmem:[#allocation5 + $0x30] sm:$0xff]
    %v54 = vld [vmem:[#allocation5 + $0x38] sm:$0xff]
    %v55 = vld [vmem:[#allocation5 + $0x40] sm:$0xff]
    %v56 = vld [vmem:[#allocation5 + $0x48] sm:$0xff]
    %v57 = vld [vmem:[#allocation5 + $0x50] sm:$0xff]
    %v58 = vld [vmem:[#allocation5 + $0x58] sm:$0xff]
    %v59 = vld [vmem:[#allocation5 + $0x60] sm:$0xff]
    %v60 = vld [vmem:[#allocation5 + $0x68] sm:$0xff]
    %v61 = vld [vmem:[#allocation5 + $0x70] sm:$0xff]
    %v62 = vld [vmem:[#allocation5 + $0x78] sm:$0xff]
    %v63 = vld [vmem:[#allocation5 + $0x80] sm:$0xff]
    %v64 = vld [vmem:[#allocation5 + $0x88] sm:$0xff]
    %v65 = vld [vmem:[#allocation5 + $0x90] sm:$0xff]
    %v66 = vld [vmem:[#allocation5 + $0x98] sm:$0xff]
    %v67 = vld [vmem:[#allocation5 + $0xa0] sm:$0xff]
    %v68 = vld [vmem:[#allocation5 + $0xa8] sm:$0xff]
    %v69 = vld [vmem:[#allocation5 + $0xb0] sm:$0xff]
    %v70 = vld [vmem:[#allocation5 + $0xb8] sm:$0xff]
    %v71 = vld [vmem:[#allocation5 + $0xc0] sm:$0xff]
    %v72 = vld [vmem:[#allocation5 + $0xc8] sm:$0xff]
    %v73 = vld [vmem:[#allocation5 + $0xd0] sm:$0xff]
    %v74 = vld [vmem:[#allocation5 + $0xd8] sm:$0xff]
    %v75 = vld [vmem:[#allocation5 + $0xe0] sm:$0xff]
    %v76 = vld [vmem:[#allocation5 + $0xe8] sm:$0xff]
    %v77 = vld [vmem:[#allocation5 + $0xf0] sm:$0xff]
    %v78 = vld [vmem:[#allocation5 + $0xf8] sm:$0xff]
    %v79 = vld [vmem:[%s2] sm:$0xf]
    %v81 = vlaneseq
    %v82 = vshrl.u32 %v81, 7
    %v83 = vsub.s32 0, %v82
    %v84 = vrot.slane %v79, %v83
    %v85 = vlaneseq
    %v86 = vshrl.u32 %v85, 7
    %v87 = vsub.s32 1, %v86
    %v88 = vrot.slane %v79, %v87
    %v89 = vlaneseq
    %v90 = vshrl.u32 %v89, 7
    %v91 = vsub.s32 2, %v90
    %v92 = vrot.slane %v79, %v91
    %v93 = vlaneseq
    %v94 = vshrl.u32 %v93, 7
    %v95 = vsub.s32 3, %v94
    %v96 = vrot.slane %v79, %v95
    %v133 = vunpack.c.l.b16 %v47
    %v134 = vunpack.c.h.b16 %v47
    %v135 = vunpack.c.l.b16 %v48
    %v136 = vunpack.c.h.b16 %v48
    %v137 = vunpack.c.l.b16 %v49
    %v138 = vunpack.c.h.b16 %v49
    %v139 = vunpack.c.l.b16 %v50
    %v140 = vunpack.c.h.b16 %v50
    %v141 = vunpack.c.l.b16 %v51
    %v142 = vunpack.c.h.b16 %v51
    %v143 = vunpack.c.l.b16 %v52
    %v144 = vunpack.c.h.b16 %v52
    %v145 = vunpack.c.l.b16 %v53
    %v146 = vunpack.c.h.b16 %v53
    %v147 = vunpack.c.l.b16 %v54
    %v148 = vunpack.c.h.b16 %v54
    %v149 = vunpack.c.l.b16 %v55
    %v150 = vunpack.c.h.b16 %v55
    %v151 = vunpack.c.l.b16 %v56
    %v152 = vunpack.c.h.b16 %v56
    %v153 = vunpack.c.l.b16 %v57
    %v154 = vunpack.c.h.b16 %v57
    %v155 = vunpack.c.l.b16 %v58
    %v156 = vunpack.c.h.b16 %v58
    %v157 = vunpack.c.l.b16 %v59
    %v158 = vunpack.c.h.b16 %v59
    %v159 = vunpack.c.l.b16 %v60
    %v160 = vunpack.c.h.b16 %v60
    %v161 = vunpack.c.l.b16 %v61
    %v162 = vunpack.c.h.b16 %v61
    %v163 = vunpack.c.l.b16 %v62
    %v164 = vunpack.c.h.b16 %v62
    %v165 = vunpack.c.l.b16 %v63
    %v166 = vunpack.c.h.b16 %v63
    %v167 = vunpack.c.l.b16 %v64
    %v168 = vunpack.c.h.b16 %v64
    %v169 = vunpack.c.l.b16 %v65
    %v170 = vunpack.c.h.b16 %v65
    %v171 = vunpack.c.l.b16 %v66
    %v172 = vunpack.c.h.b16 %v66
    %v173 = vunpack.c.l.b16 %v67
    %v174 = vunpack.c.h.b16 %v67
    %v175 = vunpack.c.l.b16 %v68
    %v176 = vunpack.c.h.b16 %v68
    %v177 = vunpack.c.l.b16 %v69
    %v178 = vunpack.c.h.b16 %v69
    %v179 = vunpack.c.l.b16 %v70
    %v180 = vunpack.c.h.b16 %v70
    %v181 = vunpack.c.l.b16 %v71
    %v182 = vunpack.c.h.b16 %v71
    %v183 = vunpack.c.l.b16 %v72
    %v184 = vunpack.c.h.b16 %v72
    %v185 = vunpack.c.l.b16 %v73
    %v186 = vunpack.c.h.b16 %v73
    %v187 = vunpack.c.l.b16 %v74
    %v188 = vunpack.c.h.b16 %v74
    %v189 = vunpack.c.l.b16 %v75
    %v190 = vunpack.c.h.b16 %v75
    %v191 = vunpack.c.l.b16 %v76
    %v192 = vunpack.c.h.b16 %v76
    %v193 = vunpack.c.l.b16 %v77
    %v194 = vunpack.c.h.b16 %v77
    %v195 = vunpack.c.l.b16 %v78
    %v196 = vunpack.c.h.b16 %v78
    %v197 = vpack.c.b16 %v137, %v133
    %v198 = vpack.c.b16 %v138, %v134
    %v199 = vpack.c.b16 %v139, %v135
    %v200 = vpack.c.b16 %v140, %v136
    %v201 = vpack.c.b16 %v145, %v141
    %v202 = vpack.c.b16 %v146, %v142
    %v203 = vpack.c.b16 %v147, %v143
    %v204 = vpack.c.b16 %v148, %v144
    %v205 = vpack.c.b16 %v153, %v149
    %v206 = vpack.c.b16 %v154, %v150
    %v207 = vpack.c.b16 %v155, %v151
    %v208 = vpack.c.b16 %v156, %v152
    %v209 = vpack.c.b16 %v161, %v157
    %v210 = vpack.c.b16 %v162, %v158
    %v211 = vpack.c.b16 %v163, %v159
    %v212 = vpack.c.b16 %v164, %v160
    %v213 = vpack.c.b16 %v169, %v165
    %v214 = vpack.c.b16 %v170, %v166
    %v215 = vpack.c.b16 %v171, %v167
    %v216 = vpack.c.b16 %v172, %v168
    %v217 = vpack.c.b16 %v177, %v173
    %v218 = vpack.c.b16 %v178, %v174
    %v219 = vpack.c.b16 %v179, %v175
    %v220 = vpack.c.b16 %v180, %v176
    %v221 = vpack.c.b16 %v185, %v181
    %v222 = vpack.c.b16 %v186, %v182
    %v223 = vpack.c.b16 %v187, %v183
    %v224 = vpack.c.b16 %v188, %v184
    %v225 = vpack.c.b16 %v193, %v189
    %v226 = vpack.c.b16 %v194, %v190
    %v227 = vpack.c.b16 %v195, %v191
    %v228 = vpack.c.b16 %v196, %v192
    %261 = vmatprep.subr.bf16.mxu0 %v198
    %262 = vmatpush1.bf16.msra.mxu0 %v197
    %263 = vmatprep.subr.bf16.mxu0 %v202
    %264 = vmatpush1.bf16.msra.mxu0 %v201
    %265 = vmatprep.subr.bf16.mxu0 %v206
    %266 = vmatpush1.bf16.msra.mxu0 %v205
    %267 = vmatprep.subr.bf16.mxu0 %v210
    %268 = vmatpush1.bf16.msra.mxu0 %v209
    %269 = vmatprep.subr.bf16.mxu0 %v214
    %270 = vmatpush1.bf16.msra.mxu0 %v213
    %271 = vmatprep.subr.bf16.mxu0 %v218
    %272 = vmatpush1.bf16.msra.mxu0 %v217
    %273 = vmatprep.subr.bf16.mxu0 %v222
    %274 = vmatpush1.bf16.msra.mxu0 %v221
    %275 = vmatprep.subr.bf16.mxu0 %v226
    %276 = vmatpush1.bf16.msra.mxu0 %v225
    %277 = vmatprep.subr.bf16.mxu0 0
    %278 = vmatpush1.bf16.msra.mxu0 0
    %279 = vmatprep.subr.bf16.mxu0 0
    %280 = vmatpush1.bf16.msra.mxu0 0
    %281 = vmatprep.subr.bf16.mxu0 0
    %282 = vmatpush1.bf16.msra.mxu0 0
    %283 = vmatprep.subr.bf16.mxu0 0
    %284 = vmatpush1.bf16.msra.mxu0 0
    %285 = vmatprep.subr.bf16.mxu0 0
    %286 = vmatpush1.bf16.msra.mxu0 0
    %287 = vmatprep.subr.bf16.mxu0 0
    %288 = vmatpush1.bf16.msra.mxu0 0
    %289 = vmatprep.subr.bf16.mxu0 0
    %290 = vmatpush1.bf16.msra.mxu0 0
    %291 = vmatprep.subr.bf16.mxu0 0
    %292 = vmatpush1.bf16.msra.mxu0 0
    %293 = vmatprep.mubr.bf16.mxu0 0
    %294 = vmatmul.mubr.bf16.gmra.mrb[0].mxu0 %v46
    %v295 = vpop.f32.mrb[0].mxu0
    %v296 = vadd.f32 %v84, %v295
    %v297 = vpop.f32.mrb[0].mxu0
    %v298 = vadd.f32 %v88, %v297
    %v299 = vpop.f32.mrb[0].mxu0
    %v300 = vpop.f32.mrb[0].mxu0
    %301 = vdwg.mxu0
    %302 = vmatprep.subr.bf16.mxu0 %v200
    %303 = vmatpush1.bf16.msra.mxu0 %v199
    %304 = vmatprep.subr.bf16.mxu0 %v204
    %305 = vmatpush1.bf16.msra.mxu0 %v203
    %306 = vmatprep.subr.bf16.mxu0 %v208
    %307 = vmatpush1.bf16.msra.mxu0 %v207
    %308 = vmatprep.subr.bf16.mxu0 %v212
    %309 = vmatpush1.bf16.msra.mxu0 %v211
    %310 = vmatprep.subr.bf16.mxu0 %v216
    %311 = vmatpush1.bf16.msra.mxu0 %v215
    %312 = vmatprep.subr.bf16.mxu0 %v220
    %313 = vmatpush1.bf16.msra.mxu0 %v219
    %314 = vmatprep.subr.bf16.mxu0 %v224
    %315 = vmatpush1.bf16.msra.mxu0 %v223
    %316 = vmatprep.subr.bf16.mxu0 %v228
    %317 = vmatpush1.bf16.msra.mxu0 %v227
    %318 = vmatprep.subr.bf16.mxu0 0
    %319 = vmatpush1.bf16.msra.mxu0 0
    %320 = vmatprep.subr.bf16.mxu0 0
    %321 = vmatpush1.bf16.msra.mxu0 0
    %322 = vmatprep.subr.bf16.mxu0 0
    %323 = vmatpush1.bf16.msra.mxu0 0
    %324 = vmatprep.subr.bf16.mxu0 0
    %325 = vmatpush1.bf16.msra.mxu0 0
    %326 = vmatprep.subr.bf16.mxu0 0
    %327 = vmatpush1.bf16.msra.mxu0 0
    %328 = vmatprep.subr.bf16.mxu0 0
    %329 = vmatpush1.bf16.msra.mxu0 0
    %330 = vmatprep.subr.bf16.mxu0 0
    %331 = vmatpush1.bf16.msra.mxu0 0
    %332 = vmatprep.subr.bf16.mxu0 0
    %333 = vmatpush1.bf16.msra.mxu0 0
    %334 = vmatprep.mubr.bf16.mxu0 0
    %335 = vmatmul.mubr.bf16.gmra.mrb[0].mxu0 %v46
    %v336 = vpop.f32.mrb[0].mxu0
    %v337 = vadd.f32 %v92, %v336
    %v338 = vpop.f32.mrb[0].mxu0
    %v339 = vadd.f32 %v96, %v338
    %v340 = vpop.f32.mrb[0].mxu0
    %v341 = vpop.f32.mrb[0].mxu0
    %342 = vdwg.mxu0
    %v343 = vld [vmem:[%s3] sm:$0x1]
    %v344 = vld [vmem:[%s3 + $0x1] sm:$0x1]
    %345 = vadd.xlane.f32.xlu0 %v296
    %v346 = vpop.xlane.xlu0 %345
    %v347 = vrcp.pop 128.0
    %v348 = vmul.f32 %v346, %v347
    %v349 = vsub.f32 %v296, %v348
    %v350 = vmul.f32 %v349, %v349
    %351 = vadd.xlane.f32.xlu0 %v350
    %v352 = vpop.xlane.xlu0 %351
    %v353 = vmul.f32 %v352, %v347
    %v354 = vadd.f32 %v353, 1e-05
    %v355 = vrsqrt.pop %v354
    %v356 = vmul.f32 %v349, %v355
    %v357 = vlaneseq
    %v358 = vshrl.u32 %v357, 7
    %v359 = vsub.s32 0, %v358
    %v360 = vrot.slane %v343, %v359
    %v361 = vmul.f32 %v356, %v360
    %v362 = vlaneseq
    %v363 = vshrl.u32 %v362, 7
    %v364 = vsub.s32 0, %v363
    %v365 = vrot.slane %v344, %v364
    %v366 = vadd.f32 %v361, %v365
    %367 = vst [vmem:[#allocation7] sm:$0xff] %v366
    %368 = vadd.xlane.f32.xlu0 %v298
    %v369 = vpop.xlane.xlu0 %368
    %v370 = vmul.f32 %v369, %v347
    %v371 = vsub.f32 %v298, %v370
    %v372 = vmul.f32 %v371, %v371
    %373 = vadd.xlane.f32.xlu0 %v372
    %v374 = vpop.xlane.xlu0 %373
    %v375 = vmul.f32 %v374, %v347
    %v376 = vadd.f32 %v375, 1e-05
    %v377 = vrsqrt.pop %v376
    %v378 = vmul.f32 %v371, %v377
    %v379 = vmul.f32 %v378, %v360
    %v380 = vadd.f32 %v379, %v365
    %381 = vst [vmem:[#allocation7 + $0x8] sm:$0xff] %v380
    %382 = vadd.xlane.f32.xlu0 %v337
    %v383 = vpop.xlane.xlu0 %382
    %v384 = vmul.f32 %v383, %v347
    %v385 = vsub.f32 %v337, %v384
    %v386 = vmul.f32 %v385, %v385
    %387 = vadd.xlane.f32.xlu0 %v386
    %v388 = vpop.xlane.xlu0 %387
    %v389 = vmul.f32 %v388, %v347
    %v390 = vadd.f32 %v389, 1e-05
    %v391 = vrsqrt.pop %v390
    %v392 = vmul.f32 %v385, %v391
    %v393 = vmul.f32 %v392, %v360
    %v394 = vadd.f32 %v393, %v365
    %395 = vst [vmem:[#allocation7 + $0x10] sm:$0xff] %v394
    %396 = vadd.xlane.f32.xlu0 %v339
    %v397 = vpop.xlane.xlu0 %396
    %v398 = vmul.f32 %v397, %v347
    %v399 = vsub.f32 %v339, %v398
    %v400 = vmul.f32 %v399, %v399
    %401 = vadd.xlane.f32.xlu0 %v400
    %v402 = vpop.xlane.xlu0 %401
    %v403 = vmul.f32 %v402, %v347
    %v404 = vadd.f32 %v403, 1e-05
    %v405 = vrsqrt.pop %v404
    %v406 = vmul.f32 %v399, %v405
    %v407 = vmul.f32 %v406, %v360
    %v408 = vadd.f32 %v407, %v365
    %409 = vst [vmem:[#allocation7 + $0x18] sm:$0xff] %v408
    // Predicated region
    $region26: #{tpu_custom_call.1} parent=1 // pred_check
      _
    $region27: #{tpu_custom_call.1} parent=1 // pred_check_branch
      %411 = sbr.rel (0) target = $region29
    $region28: #{tpu_custom_call.1} parent=1 // pred_region
      %s413 = ssub.s32 512, 512
      %414 = vsyncadd [#allocation4], %s413
      %s416 = sshll.u32 [#allocation7], 4
      %s417 = int_to_ptr.vmem [resolvable:$true] %s416
      %419 = dma.vmem_to_hbm [thread:$0]  %s417, 512, %s4, [#allocation4]
    $region29: #{tpu_custom_call.1} parent=1 // pred_fallthru
      _
    // Predicated region
    $region30: #{tpu_custom_call.1} parent=1 // pred_check
      _
    $region31: #{tpu_custom_call.1} parent=1 // pred_check_branch
      %421 = sbr.rel (0) target = $region33
    $region32: #{tpu_custom_call.1} parent=1 // pred_region
      %422 = dma.done [#allocation4], 512
    $region33: #{tpu_custom_call.1} parent=1 // pred_fallthru
      _
    %423 = vsyncpa [#allocation3], 1
    %424 = vsyncpa [#allocation6], 1
    %425 = vsyncpa [#allocation4], 1

</llo_original>
